<compile_context>
chip_gen: v7x
topology: tpu7x:2x2x1
jax: 0.10.0
libtpu: 0.0.40
codegen_flags: <defaults>
</compile_context>

<pallas_src>
import functools
import numpy as np

import jax
import jax.numpy as jnp
from jax.experimental import pallas as pl
from jax.experimental.pallas import tpu as pltpu

# ----------------------------- model config (Swin-T 3D) -----------------------
EMBED_DIM = 96
DEPTHS = (2, 2, 6, 2)
NUM_HEADS = (3, 6, 12, 24)
PATCH_SIZE = (2, 4, 4)
WINDOW_SIZE = (8, 7, 7)
MLP_RATIO = 4.0
LN_EPS = 1e-5

TM_MAX_LN = 1024   # row tile for the standalone layernorm kernel
TN_MAX = 768       # col tile for matmul-style kernels


def _tpu_budget():
    """Generation-aware tiling: large tiles / scoped VMEM on 128MiB-VMEM chips
    (v5e/v6e); conservative settings on 64MiB/TC (v7x-class) or unknown HW."""
    try:
        info = pltpu.get_tpu_info()
        vmem = getattr(info, "vmem_capacity_bytes", None)
        if vmem is not None and vmem >= 100 * 1024 * 1024:
            return 1024, 64 * 1024 * 1024
    except Exception:
        pass
    return 512, 40 * 1024 * 1024


TM_MAX, _VMEM_LIMIT = _tpu_budget()

_CP_1D = pltpu.CompilerParams(dimension_semantics=("parallel",),
                              vmem_limit_bytes=_VMEM_LIMIT)
_CP_2D = pltpu.CompilerParams(dimension_semantics=("parallel", "parallel"),
                              vmem_limit_bytes=_VMEM_LIMIT)
_CP_2D_ARB = pltpu.CompilerParams(dimension_semantics=("parallel", "arbitrary"),
                                  vmem_limit_bytes=_VMEM_LIMIT)


def _bspec(shape, index_map, buffer_count=None):
    """BlockSpec with optional pipeline_mode=pl.Buffered(n); falls back to the
    default double-buffered spec if the API/argument is unavailable."""
    if buffer_count is not None and hasattr(pl, "Buffered"):
        try:
            return pl.BlockSpec(shape, index_map,
                                pipeline_mode=pl.Buffered(buffer_count))
        except (TypeError, ValueError):
            pass
    return pl.BlockSpec(shape, index_map)


# ----------------------------- tiling helpers ----------------------------------
def _round_up(x, m):
    return ((x + m - 1) // m) * m


def _row_tile(M, max_tile):
    """Return (tile_rows, padded_rows)."""
    Mp = _round_up(M, 8)
    if Mp <= max_tile:
        return Mp, Mp
    return max_tile, _round_up(M, max_tile)


def _col_tile(N, max_tile=TN_MAX):
    """Largest tile <= max_tile that divides N and is lane-aligned (or full N)."""
    if N <= max_tile:
        return N
    for t in range(max_tile, 0, -128):
        if N % t == 0:
            return t
    return N


def _head_group(num_heads, head_dim):
    """Heads per attention grid step: 128 output lanes per group if possible."""
    if 128 % head_dim == 0:
        g = 128 // head_dim
        if num_heads % g == 0:
            return g
    return num_heads


# ----------------------------- Pallas kernels ----------------------------------
def _linear_kernel(x_ref, w_ref, b_ref, o_ref):
    x = x_ref[...].astype(jnp.bfloat16)                 # bf16 MXU operands
    acc = jnp.dot(x, w_ref[...], preferred_element_type=jnp.float32)
    o_ref[...] = (acc + b_ref[...]).astype(o_ref.dtype)


@functools.partial(jax.jit, static_argnames=("out_dtype",))
def _linear_call(x2, w, b2, out_dtype):
    Mp, K = x2.shape
    N = w.shape[1]
    tm, _ = _row_tile(Mp, TM_MAX)
    tn = _col_tile(N)
    return pl.pallas_call(
        _linear_kernel,
        out_shape=jax.ShapeDtypeStruct((Mp, N), out_dtype),
        grid=(Mp // tm, N // tn),
        in_specs=[pl.BlockSpec((tm, K), lambda i, j: (i, 0)),
                  pl.BlockSpec((K, tn), lambda i, j: (0, j)),
                  pl.BlockSpec((1, tn), lambda i, j: (0, j))],
        out_specs=pl.BlockSpec((tm, tn), lambda i, j: (i, j)),
        compiler_params=_CP_2D,
    )(x2, w, b2)


def pallas_linear(x, w, b=None, out_dtype=jnp.float32):
    """y = x @ w + b with x (..., K), w (K, N) [bf16 weights], f32 accumulation."""
    lead, K = x.shape[:-1], x.shape[-1]
    N = w.shape[1]
    x2 = jnp.reshape(x, (-1, K))
    M = x2.shape[0]
    _, Mp = _row_tile(M, TM_MAX)
    if Mp != M:
        x2 = jnp.pad(x2, ((0, Mp - M), (0, 0)))
    if b is None:
        b = jnp.zeros((N,), jnp.float32)
    out = _linear_call(x2, w, b.reshape(1, N).astype(jnp.float32),
                       jnp.dtype(out_dtype))
    return out[:M].reshape(lead + (N,))


def _layernorm_kernel(x_ref, g_ref, b_ref, o_ref):
    x = x_ref[...].astype(jnp.float32)                  # LN stats in f32
    mu = jnp.mean(x, axis=-1, keepdims=True)
    var = jnp.mean(jnp.square(x - mu), axis=-1, keepdims=True)
    y = (x - mu) * jax.lax.rsqrt(var + LN_EPS)
    o_ref[...] = (y * g_ref[...] + b_ref[...]).astype(o_ref.dtype)


@functools.partial(jax.jit, static_argnames=("out_dtype",))
def _layernorm_call(x2, g2, b2, out_dtype):
    Mp, C = x2.shape
    tm, _ = _row_tile(Mp, TM_MAX_LN)
    return pl.pallas_call(
        _layernorm_kernel,
        out_shape=jax.ShapeDtypeStruct((Mp, C), out_dtype),
        grid=(Mp // tm,),
        in_specs=[pl.BlockSpec((tm, C), lambda i: (i, 0)),
                  pl.BlockSpec((1, C), lambda i: (0, 0)),
                  pl.BlockSpec((1, C), lambda i: (0, 0))],
        out_specs=pl.BlockSpec((tm, C), lambda i: (i, 0)),
        compiler_params=_CP_1D,
    )(x2, g2, b2)


def pallas_layernorm(x, gamma, beta, out_dtype=jnp.float32):
    lead, C = x.shape[:-1], x.shape[-1]
    x2 = jnp.reshape(x, (-1, C))
    M = x2.shape[0]
    _, Mp = _row_tile(M, TM_MAX_LN)
    if Mp != M:
        x2 = jnp.pad(x2, ((0, Mp - M), (0, 0)))
    out = _layernorm_call(x2, gamma.reshape(1, C).astype(jnp.float32),
                          beta.reshape(1, C).astype(jnp.float32),
                          jnp.dtype(out_dtype))
    return out[:M].reshape(lead + (C,))


def _ln_linear_kernel(x_ref, g_ref, bl_ref, w_ref, b_ref, o_ref, y_ref):
    # Fused LayerNorm (f32 stats) -> bf16 matmul (f32 accumulation).
    # LN is computed only for the first column tile and cached in VMEM scratch.
    @pl.when(pl.program_id(1) == 0)
    def _():
        x = x_ref[...].astype(jnp.float32)
        mu = jnp.mean(x, axis=-1, keepdims=True)
        var = jnp.mean(jnp.square(x - mu), axis=-1, keepdims=True)
        y = (x - mu) * jax.lax.rsqrt(var + LN_EPS) * g_ref[...] + bl_ref[...]
        y_ref[...] = y.astype(jnp.bfloat16)
    acc = jnp.dot(y_ref[...], w_ref[...], preferred_element_type=jnp.float32)
    o_ref[...] = (acc + b_ref[...]).astype(o_ref.dtype)


@functools.partial(jax.jit, static_argnames=("out_dtype",))
def _ln_linear_call(x2, g2, bl2, w, b2, out_dtype):
    Mp, C = x2.shape
    N = w.shape[1]
    tm, _ = _row_tile(Mp, TM_MAX)
    tn = _col_tile(N)
    return pl.pallas_call(
        _ln_linear_kernel,
        out_shape=jax.ShapeDtypeStruct((Mp, N), out_dtype),
        grid=(Mp // tm, N // tn),
        in_specs=[pl.BlockSpec((tm, C), lambda i, j: (i, 0)),
                  pl.BlockSpec((1, C), lambda i, j: (0, 0)),
                  pl.BlockSpec((1, C), lambda i, j: (0, 0)),
                  pl.BlockSpec((C, tn), lambda i, j: (0, j)),
                  pl.BlockSpec((1, tn), lambda i, j: (0, j))],
        out_specs=pl.BlockSpec((tm, tn), lambda i, j: (i, j)),
        scratch_shapes=[pltpu.VMEM((tm, C), jnp.bfloat16)],
        compiler_params=_CP_2D_ARB,
    )(x2, g2, bl2, w, b2)


def pallas_ln_linear(x, gamma, beta, w, b=None, out_dtype=jnp.float32):
    """Fused y = LayerNorm(x) @ w + b."""
    lead, C = x.shape[:-1], x.shape[-1]
    N = w.shape[1]
    x2 = jnp.reshape(x, (-1, C))
    M = x2.shape[0]
    _, Mp = _row_tile(M, TM_MAX)
    if Mp != M:
        x2 = jnp.pad(x2, ((0, Mp - M), (0, 0)))
    if b is None:
        b = jnp.zeros((N,), jnp.float32)
    out = _ln_linear_call(x2, gamma.reshape(1, C).astype(jnp.float32),
                          beta.reshape(1, C).astype(jnp.float32), w,
                          b.reshape(1, N).astype(jnp.float32),
                          jnp.dtype(out_dtype))
    return out[:M].reshape(lead + (N,))


def _attention_kernel(qkv_ref, rpb_ref, *rest, group, head_dim, has_mask):
    # qkv_ref : (1, N, 3*gw) bf16 head-grouped [q_g | k_g | v_g] layout
    #           (softmax scale already folded into the q projection).
    # rpb_ref : (num_heads, N, N) bf16, constant block index (resident).
    # mask_ref: (1, N, N) bf16 shift mask (only when has_mask).
    # o_ref   : (1, N, gw) bf16 — one lane-dense store per head group.
    if has_mask:
        mask_ref, o_ref = rest
    else:
        (o_ref,) = rest
    gw = group * head_dim
    gi = pl.program_id(1)
    qkv = qkv_ref[0]
    if has_mask:
        m = rest[0][0].astype(jnp.float32)
    outs = []
    for hh in range(group):
        q = qkv[:, hh * head_dim:(hh + 1) * head_dim]
        k = qkv[:, gw + hh * head_dim:gw + (hh + 1) * head_dim]
        v = qkv[:, 2 * gw + hh * head_dim:2 * gw + (hh + 1) * head_dim]
        s = jax.lax.dot_general(q, k, (((1,), (1,)), ((), ())),
                                preferred_element_type=jnp.float32)
        s = s + rpb_ref[gi * group + hh].astype(jnp.float32)
        if has_mask:
            s = s + m
        s = s - jnp.max(s, axis=-1, keepdims=True)
        p = jnp.exp(s)                                   # f32 softmax
        p = p * pl.reciprocal(jnp.sum(p, axis=-1, keepdims=True), approx=True)
        outs.append(jnp.dot(p.astype(jnp.bfloat16), v,
                            preferred_element_type=jnp.float32))
    out = outs[0] if len(outs) == 1 else jnp.concatenate(outs, axis=-1)
    o_ref[0] = out.astype(o_ref.dtype)


@functools.partial(jax.jit, static_argnames=("group", "head_dim"))
def _attention_call(qkv, rpb, mask, *, group, head_dim):
    BW, N, C3 = qkv.shape
    C = C3 // 3
    num_heads = C // head_dim
    ngroups = num_heads // group
    gw = group * head_dim
    has_mask = mask is not None
    kern = functools.partial(_attention_kernel, group=group, head_dim=head_dim,
                             has_mask=has_mask)
    in_specs = [
        # grouped qkv chunk for this head group (same total traffic as the full
        # qkv per window, but ~ngroups-x less VMEM per step)
        pl.BlockSpec((1, N, 3 * gw), lambda i, h: (i, 0, h)),
        # relative-position bias: bf16, un-tiled, constant block index -> stays
        # resident in VMEM; Buffered(1) avoids an unnecessary second buffer.
        _bspec((num_heads, N, N), lambda i, h: (0, 0, 0), buffer_count=1),
    ]
    args = [qkv, rpb]
    if has_mask:
        nWm = mask.shape[0]
        in_specs.append(pl.BlockSpec((1, N, N), lambda i, h: (i % nWm, 0, 0)))
        args.append(mask)
    return pl.pallas_call(
        kern,
        out_shape=jax.ShapeDtypeStruct((BW, N, C), jnp.bfloat16),
        grid=(BW, ngroups),
        in_specs=in_specs,
        out_specs=pl.BlockSpec((1, N, gw), lambda i, h: (i, 0, h)),
        compiler_params=_CP_2D_ARB,
    )(*args)


# ----------------------------- Swin-3D helpers (glue) ---------------------------
def get_window_size(x_size, window_size, shift_size=None):
    use_w = list(window_size)
    use_s = list(shift_size) if shift_size is not None else None
    for i in range(len(x_size)):
        if x_size[i] <= window_size[i]:
            use_w[i] = x_size[i]
            if shift_size is not None:
                use_s[i] = 0
    if shift_size is None:
        return tuple(use_w)
    return tuple(use_w), tuple(use_s)


def window_partition(x, wsz):
    B, D, H, W, C = x.shape
    wd, wh, ww = wsz
    x = x.reshape(B, D // wd, wd, H // wh, wh, W // ww, ww, C)
    x = jnp.transpose(x, (0, 1, 3, 5, 2, 4, 6, 7))
    return x.reshape(-1, wd * wh * ww, C)


def window_reverse(windows, wsz, B, D, H, W):
    wd, wh, ww = wsz
    x = windows.reshape(B, D // wd, H // wh, W // ww, wd, wh, ww, -1)
    x = jnp.transpose(x, (0, 1, 4, 2, 5, 3, 6, 7))
    return x.reshape(B, D, H, W, -1)


def compute_mask(Dp, Hp, Wp, window_size, shift_size):
    img_mask = np.zeros((1, Dp, Hp, Wp, 1), np.float32)
    cnt = 0
    for d in (slice(-window_size[0]), slice(-window_size[0], -shift_size[0]),
              slice(-shift_size[0], None)):
        for h in (slice(-window_size[1]), slice(-window_size[1], -shift_size[1]),
                  slice(-shift_size[1], None)):
            for w in (slice(-window_size[2]), slice(-window_size[2], -shift_size[2]),
                      slice(-shift_size[2], None)):
                img_mask[:, d, h, w, :] = cnt
                cnt += 1
    mask_windows = window_partition(jnp.asarray(img_mask), window_size)[..., 0]
    diff = mask_windows[:, None, :] - mask_windows[:, :, None]
    # 0 / -100 are exactly representable in bf16.
    return jnp.where(diff != 0, -100.0, 0.0).astype(jnp.bfloat16)


def compute_rel_pos_index(window_size):
    wd, wh, ww = window_size
    coords = np.stack(np.meshgrid(np.arange(wd), np.arange(wh), np.arange(ww),
                                  indexing="ij"))
    coords_flat = coords.reshape(3, -1)
    rel = coords_flat[:, :, None] - coords_flat[:, None, :]
    rel = rel.transpose(1, 2, 0).astype(np.int64)
    rel[:, :, 0] += wd - 1
    rel[:, :, 1] += wh - 1
    rel[:, :, 2] += ww - 1
    rel[:, :, 0] *= (2 * wh - 1) * (2 * ww - 1)
    rel[:, :, 1] *= (2 * ww - 1)
    return rel.sum(-1)


REL_POS_INDEX = compute_rel_pos_index(WINDOW_SIZE)   # (392, 392)


def _grouped_qkv_perm(num_heads, head_dim, group):
    """Column permutation mapping [q_all|k_all|v_all] -> per-head-group
    [q_g|k_g|v_g] blocks of 3*group*head_dim contiguous columns."""
    C = num_heads * head_dim
    gw = group * head_dim
    perm = []
    for gi in range(num_heads // group):
        for comp in range(3):
            base = comp * C + gi * gw
            perm.extend(range(base, base + gw))
    return np.asarray(perm, dtype=np.int64)


# ----------------------------- model forward ------------------------------------
def window_attention(x, blk, num_heads, mask):
    B_, N, C = x.shape
    head_dim = C // num_heads
    group = _head_group(num_heads, head_dim)
    # qkv projection emits the head-grouped column layout; softmax scale is
    # pre-folded into the q rows of qkv_w/qkv_b (see prepare_params).
    qkv = pallas_linear(x, blk["qkv_w"], blk["qkv_b"],
                        out_dtype=jnp.bfloat16)          # (B_, N, 3C) bf16
    rpb = blk["rpb"][:, :N, :N]                          # (H, N, N) bf16
    out = _attention_call(qkv, rpb, mask, group=group, head_dim=head_dim)
    return pallas_linear(out, blk["proj_w"], blk["proj_b"])   # f32 for residual


def swin_block(x, blk, num_heads, shift_size, mask_matrix):
    B, D, H, W, C = x.shape
    wsz, ssz = get_window_size((D, H, W), WINDOW_SIZE, shift_size)

    shortcut = x
    xn = pallas_layernorm(x, blk["norm1_g"], blk["norm1_b"],
                          out_dtype=jnp.bfloat16)
    pad_d1 = (wsz[0] - D % wsz[0]) % wsz[0]
    pad_b = (wsz[1] - H % wsz[1]) % wsz[1]
    pad_r = (wsz[2] - W % wsz[2]) % wsz[2]
    xn = jnp.pad(xn, ((0, 0), (0, pad_d1), (0, pad_b), (0, pad_r), (0, 0)))
    _, Dp, Hp, Wp, _ = xn.shape

    if any(s > 0 for s in ssz):
        shifted_x = jnp.roll(xn, shift=(-ssz[0], -ssz[1], -ssz[2]), axis=(1, 2, 3))
        attn_mask = mask_matrix
    else:
        shifted_x = xn
        attn_mask = None        # specialized no-mask attention kernel

    x_windows = window_partition(shifted_x, wsz)          # (B*nW, N, C) bf16
    attn_windows = window_attention(x_windows, blk, num_heads, attn_mask)
    attn_windows = attn_windows.reshape((-1,) + wsz + (C,))
    shifted_x = window_reverse(attn_windows, wsz, B, Dp, Hp, Wp)

    if any(s > 0 for s in ssz):
        xa = jnp.roll(shifted_x, shift=ssz, axis=(1, 2, 3))
    else:
        xa = shifted_x
    xa = xa[:, :D, :H, :W, :]

    # TODO(synk): DropPath (stochastic depth, rate up to 0.4) treated as identity (eval).
    x = shortcut + xa

    # MLP: fused LN+fc1 (bf16 hidden), exact GELU, fc2 back to f32.
    y = pallas_ln_linear(x, blk["norm2_g"], blk["norm2_b"],
                         blk["fc1_w"], blk["fc1_b"], out_dtype=jnp.bfloat16)
    # TODO(synk): exact erf-GELU left as an XLA elementwise op (not fused in-kernel)
    # to preserve torch GELU semantics without relying on in-kernel erf lowering.
    y = jax.nn.gelu(y, approximate=False)
    y = pallas_linear(y, blk["fc2_w"], blk["fc2_b"])       # f32
    return x + y


def basic_layer(x, layer_p, num_heads, has_downsample):
    B, C, D, H, W = x.shape
    layer_shift = tuple(w // 2 for w in WINDOW_SIZE)
    wsz, ssz = get_window_size((D, H, W), WINDOW_SIZE, layer_shift)
    x = jnp.transpose(x, (0, 2, 3, 4, 1))                  # b d h w c
    Dp = int(np.ceil(D / wsz[0])) * wsz[0]
    Hp = int(np.ceil(H / wsz[1])) * wsz[1]
    Wp = int(np.ceil(W / wsz[2])) * wsz[2]
    attn_mask = compute_mask(Dp, Hp, Wp, wsz, ssz)         # (nW, N, N) bf16
    for bi, blk in enumerate(layer_p["blocks"]):
        blk_shift = (0, 0, 0) if bi % 2 == 0 else layer_shift
        x = swin_block(x, blk, num_heads, blk_shift, attn_mask)
    x = x.reshape(B, D, H, W, -1)
    if has_downsample:                                     # PatchMerging
        ds = layer_p["downsample"]
        x = jnp.pad(x, ((0, 0), (0, 0), (0, H % 2), (0, W % 2), (0, 0)))
        x0 = x[:, :, 0::2, 0::2, :]
        x1 = x[:, :, 1::2, 0::2, :]
        x2 = x[:, :, 0::2, 1::2, :]
        x3 = x[:, :, 1::2, 1::2, :]
        x = jnp.concatenate([x0, x1, x2, x3], axis=-1)
        # Fused LN + reduction linear (bias=False)
        x = pallas_ln_linear(x, ds["norm_g"], ds["norm_b"], ds["reduction_w"], None)
    return jnp.transpose(x, (0, 4, 1, 2, 3))               # b c d h w


def patch_embed_forward(x, pe):
    # bf16 patchify halves transpose + x-DMA traffic (memory-bound path).
    x = x.astype(jnp.bfloat16)
    B, C, T, H, W = x.shape
    pd, ph, pw = PATCH_SIZE
    if W % pw:
        x = jnp.pad(x, ((0, 0),) * 4 + ((0, pw - W % pw),))
    if H % ph:
        x = jnp.pad(x, ((0, 0),) * 3 + ((0, ph - H % ph), (0, 0)))
    if T % pd:
        x = jnp.pad(x, ((0, 0), (0, 0), (0, pd - T % pd), (0, 0), (0, 0)))
    B, C, T, H, W = x.shape
    Do, Ho, Wo = T // pd, H // ph, W // pw
    # Conv3d with stride == kernel == patch_size  ==  patchify + matmul
    xp = x.reshape(B, C, Do, pd, Ho, ph, Wo, pw)
    xp = jnp.transpose(xp, (0, 2, 4, 6, 1, 3, 5, 7))       # (c, kt, kh, kw) order
    xp = xp.reshape(B * Do * Ho * Wo, C * pd * ph * pw)
    out = pallas_linear(xp, pe["proj_w2d"], pe["proj_b"])
    out = pallas_layernorm(out, pe["norm_g"], pe["norm_b"])   # patch_norm=True
    out = out.reshape(B, Do, Ho, Wo, EMBED_DIM)
    return jnp.transpose(out, (0, 4, 1, 2, 3))             # (B, 96, D', H', W')


def swint_forward(x, params):
    """x: (B, C, T, H, W) float32 — same convention as SwinT.forward."""
    x = patch_embed_forward(x, params["patch_embed"])
    # pos_drop(p=0.) == identity
    for i, layer_p in enumerate(params["layers"]):
        x = basic_layer(x, layer_p, NUM_HEADS[i],
                        has_downsample=(i < len(DEPTHS) - 1))
    x = jnp.transpose(x, (0, 2, 3, 4, 1))                  # n c d h w -> n d h w c
    x = pallas_layernorm(x, params["norm_g"], params["norm_b"])
    return jnp.transpose(x, (0, 4, 1, 2, 3))               # back to n c d h w


# ----------------------------- deterministic params -----------------------------
def trunc_normal(key, shape, std=0.02):
    return (std * jax.random.truncated_normal(key, -2.0, 2.0, shape)).astype(jnp.float32)


def init_params(key):
    n_keys = 1 + sum(DEPTHS) * 5 + (len(DEPTHS) - 1)
    keys = iter(jax.random.split(key, n_keys))
    params = {"patch_embed": {
        "proj_w": trunc_normal(next(keys), (EMBED_DIM, 3) + PATCH_SIZE),
        "proj_b": jnp.zeros((EMBED_DIM,), jnp.float32),
        "norm_g": jnp.ones((EMBED_DIM,), jnp.float32),
        "norm_b": jnp.zeros((EMBED_DIM,), jnp.float32),
    }}
    table_rows = ((2 * WINDOW_SIZE[0] - 1) * (2 * WINDOW_SIZE[1] - 1)
                  * (2 * WINDOW_SIZE[2] - 1))
    layers = []
    for i, (depth, nh) in enumerate(zip(DEPTHS, NUM_HEADS)):
        dim = EMBED_DIM * (2 ** i)
        hidden = int(dim * MLP_RATIO)
        blocks = []
        for _ in range(depth):
            blocks.append({
                "norm1_g": jnp.ones((dim,), jnp.float32),
                "norm1_b": jnp.zeros((dim,), jnp.float32),
                "qkv_w": trunc_normal(next(keys), (dim, 3 * dim)),
                "qkv_b": jnp.zeros((3 * dim,), jnp.float32),
                "rpb_table": trunc_normal(next(keys), (table_rows, nh)),
                "proj_w": trunc_normal(next(keys), (dim, dim)),
                "proj_b": jnp.zeros((dim,), jnp.float32),
                "norm2_g": jnp.ones((dim,), jnp.float32),
                "norm2_b": jnp.zeros((dim,), jnp.float32),
                "fc1_w": trunc_normal(next(keys), (dim, hidden)),
                "fc1_b": jnp.zeros((hidden,), jnp.float32),
                "fc2_w": trunc_normal(next(keys), (hidden, dim)),
                "fc2_b": jnp.zeros((dim,), jnp.float32),
            })
        layer = {"blocks": blocks}
        if i < len(DEPTHS) - 1:
            layer["downsample"] = {
                "norm_g": jnp.ones((4 * dim,), jnp.float32),
                "norm_b": jnp.zeros((4 * dim,), jnp.float32),
                "reduction_w": trunc_normal(next(keys), (4 * dim, 2 * dim)),
            }
        layers.append(layer)
    params["layers"] = layers
    num_features = EMBED_DIM * 2 ** (len(DEPTHS) - 1)
    params["norm_g"] = jnp.ones((num_features,), jnp.float32)
    params["norm_b"] = jnp.zeros((num_features,), jnp.float32)
    return params


def prepare_params(params):
    """Inference prep: cast matmul weights to bf16, pre-gather the rel-pos
    bias into (H, N, N) bf16, permute qkv columns into the head-grouped
    [q|k|v] layout with the softmax scale folded into q, pre-flatten the
    patch-embed conv weight. LN / bias params stay f32."""
    bf16 = jnp.bfloat16
    idx = np.asarray(REL_POS_INDEX).reshape(-1)
    Nw = REL_POS_INDEX.shape[0]
    pe = params["patch_embed"]
    new_pe = {
        "proj_w2d": jnp.transpose(pe["proj_w"].reshape(EMBED_DIM, -1)).astype(bf16),
        "proj_b": pe["proj_b"],
        "norm_g": pe["norm_g"],
        "norm_b": pe["norm_b"],
    }
    new_layers = []
    for li, layer in enumerate(params["layers"]):
        nh = NUM_HEADS[li]
        dim = EMBED_DIM * (2 ** li)
        hd = dim // nh
        group = _head_group(nh, hd)
        scale = hd ** -0.5
        perm = _grouped_qkv_perm(nh, hd, group)
        new_blocks = []
        for blk in layer["blocks"]:
            rpb = blk["rpb_table"][idx].reshape(Nw, Nw, nh)
            rpb = jnp.transpose(rpb, (2, 0, 1)).astype(bf16)   # (H, Nw, Nw) bf16
            qkv_w = blk["qkv_w"]
            qkv_w = jnp.concatenate([qkv_w[:, :dim] * scale, qkv_w[:, dim:]], axis=1)
            qkv_w = qkv_w[:, perm].astype(bf16)
            qkv_b = blk["qkv_b"]
            qkv_b = jnp.concatenate([qkv_b[:dim] * scale, qkv_b[dim:]])[perm]
            new_blocks.append({
                "norm1_g": blk["norm1_g"], "norm1_b": blk["norm1_b"],
                "qkv_w": qkv_w, "qkv_b": qkv_b,
                "rpb": rpb,
                "proj_w": blk["proj_w"].astype(bf16), "proj_b": blk["proj_b"],
                "norm2_g": blk["norm2_g"], "norm2_b": blk["norm2_b"],
                "fc1_w": blk["fc1_w"].astype(bf16), "fc1_b": blk["fc1_b"],
                "fc2_w": blk["fc2_w"].astype(bf16), "fc2_b": blk["fc2_b"],
            })
        new_layer = {"blocks": new_blocks}
        if "downsample" in layer:
            ds = layer["downsample"]
            new_layer["downsample"] = {
                "norm_g": ds["norm_g"], "norm_b": ds["norm_b"],
                "reduction_w": ds["reduction_w"].astype(bf16),
            }
        new_layers.append(new_layer)
    return {"patch_embed": new_pe, "layers": new_layers,
            "norm_g": params["norm_g"], "norm_b": params["norm_b"]}


if __name__ == "__main__":
    key = jax.random.PRNGKey(0)
    pkey, xkey = jax.random.split(key)
    params = prepare_params(init_params(pkey))
    # small input consistent with (bs, channels, time, H, W)
    x = jax.random.normal(xkey, (2, 3, 2, 32, 32), dtype=jnp.float32)
    fwd = jax.jit(swint_forward)          # top-level jit: fuses the glue ops
    out = jax.block_until_ready(fwd(x, params))
    expected = (2, EMBED_DIM * 2 ** (len(DEPTHS) - 1), 1, 1, 1)
    assert out.shape == expected, (out.shape, expected)
    assert bool(jnp.all(jnp.isfinite(out)))
    print("KERNEL_OK")
</pallas_src>

<mosaic_0001>
module attributes {stable_mosaic.version = 11 : i64} {
  func.func @_linear_kernel(%arg0: i32, %arg1: i32, %arg2: memref<128x96xbf16, #tpu.memory_space<vmem>>, %arg3: memref<96x96xbf16, #tpu.memory_space<vmem>>, %arg4: memref<1x96xf32, #tpu.memory_space<vmem>>, %arg5: memref<128x96xf32, #tpu.memory_space<vmem>>) attributes {dimension_semantics = [#tpu.dimension_semantics<parallel>, #tpu.dimension_semantics<parallel>], iteration_bounds = array<i64: 1, 1>, scalar_prefetch = 0 : i64, scratch_operands = 0 : i64, tpu.core_type = #tpu.core_type<tc>, window_params = [{transform_indices = @transform_0, window_bounds = array<i64: 128, 96>}, {transform_indices = @transform_1, window_bounds = array<i64: 96, 96>}, {transform_indices = @transform_2, window_bounds = array<i64: 1, 96>}, {transform_indices = @transform_3, window_bounds = array<i64: 128, 96>}]} {
    %c0 = arith.constant 0 : index
    %c0_0 = arith.constant 0 : index
    %0 = vector.load %arg2[%c0, %c0_0] : memref<128x96xbf16, #tpu.memory_space<vmem>>, vector<128x96xbf16>
    %c0_1 = arith.constant 0 : index
    %c0_2 = arith.constant 0 : index
    %1 = vector.load %arg3[%c0_1, %c0_2] : memref<96x96xbf16, #tpu.memory_space<vmem>>, vector<96x96xbf16>
    %cst = arith.constant dense<0.000000e+00> : vector<128x96xf32>
    %2 = tpu.matmul %0, %1, %cst {dimension_numbers = #tpu.dot_dimension_numbers<[1], [0], [0], [1], [0, 0, 1, 1], [], []>} : vector<128x96xbf16>, vector<96x96xbf16>, vector<128x96xf32> -> vector<128x96xf32>
    %c0_3 = arith.constant 0 : index
    %c0_4 = arith.constant 0 : index
    %3 = vector.load %arg4[%c0_3, %c0_4] : memref<1x96xf32, #tpu.memory_space<vmem>>, vector<1x96xf32>
    %4 = vector.broadcast %3 : vector<1x96xf32> to vector<128x96xf32>
    %5 = arith.addf %2, %4 : vector<128x96xf32>
    %c0_5 = arith.constant 0 : index
    %c0_6 = arith.constant 0 : index
    %6 = vector.load %arg5[%c0_5, %c0_6] : memref<128x96xf32, #tpu.memory_space<vmem>>, vector<128x96xf32>
    tpu.vector_store %arg5[%c0_5, %c0_6], %5 {strides = array<i32>} : memref<128x96xf32, #tpu.memory_space<vmem>>, vector<128x96xf32>,
    return
  }
  func.func @transform_0(%arg0: i32, %arg1: i32) -> (i32, i32) {
    %c0_i32 = arith.constant 0 : i32
    %c0_i32_0 = arith.constant 0 : i32
    return %arg0, %c0_i32 : i32, i32
  }
  func.func @transform_1(%arg0: i32, %arg1: i32) -> (i32, i32) {
    %c0_i32 = arith.constant 0 : i32
    %c0_i32_0 = arith.constant 0 : i32
    return %c0_i32, %arg1 : i32, i32
  }
  func.func @transform_2(%arg0: i32, %arg1: i32) -> (i32, i32) {
    %c0_i32 = arith.constant 0 : i32
    %c0_i32_0 = arith.constant 0 : i32
    return %c0_i32, %arg1 : i32, i32
  }
  func.func @transform_3(%arg0: i32, %arg1: i32) -> (i32, i32) {
    %c0_i32 = arith.constant 0 : i32
    return %arg0, %arg1 : i32, i32
  }
}

</mosaic_0001>

<llo_original>
// kernel: _linear_call.1
$region0: #{_linear_call.1}
  #allocation0 [shape = 'u32[]', space=smem, size = 0x4, offset = 0x4, fixed_abs, tag = 'smem constant byte address 0x4 - core index']
  #allocation1 [shape = 'u32[144,128]{1,0:T(1,128)}', space=vmem, size = 0x12000, scoped, tag = 'internal scratch']
  %s0 = inlined_call_operand.vmem [shape: bf16[128,96], index: 0, kind: input, shape index: {}]
  %s1 = inlined_call_operand.vmem [shape: bf16[96,96], index: 1, kind: input, shape index: {}]
  %s2 = inlined_call_operand.vmem [shape: f32[1,96], index: 2, kind: input, shape index: {}]
  %s3 = inlined_call_operand.vmem [shape: f32[128,96], index: 3, kind: output, shape index: {}]
  %s4 = sld [smem:[#allocation0]]
  $region22: #{_linear_call.1} parent=0
    _
  %s6 = ssub.s32 1, %s4
  %s7 = scalar_select 0, %s6, %s4
  // Predicated region
  $region2: #{_linear_call.1} parent=0 // pred_check
    _
  $region3: #{_linear_call.1} parent=0 // pred_check_branch
    %9 = sbr.rel (0) target = $region5
  $region4: #{_linear_call.1} parent=0 // pred_region
    _
  $region5: #{_linear_call.1} parent=0 // pred_fallthru
    _
  // Predicated region
  $region6: #{_linear_call.1} parent=0 // pred_check
    _
  $region7: #{_linear_call.1} parent=0 // pred_check_branch
    %11 = sbr.rel (0) target = $region9
  $region8: #{_linear_call.1} parent=0 // pred_region
    _
  $region9: #{_linear_call.1} parent=0 // pred_fallthru
    _
  // Predicated region
  $region10: #{_linear_call.1} parent=0 // pred_check
    _
  $region11: #{_linear_call.1} parent=0 // pred_check_branch
    %13 = sbr.rel (0) target = $region13
  $region12: #{_linear_call.1} parent=0 // pred_region
    _
  $region13: #{_linear_call.1} parent=0 // pred_fallthru
    _
  %v15 = vld [vmem:[%s0] sm:$0xf]
  %v16 = vld [vmem:[%s0 + $0x4] sm:$0xf]
  %v17 = vld [vmem:[%s0 + $0x8] sm:$0xf]
  %v18 = vld [vmem:[%s0 + $0xc] sm:$0xf]
  %v19 = vld [vmem:[%s0 + $0x10] sm:$0xf]
  %v20 = vld [vmem:[%s0 + $0x14] sm:$0xf]
  %v21 = vld [vmem:[%s0 + $0x18] sm:$0xf]
  %v22 = vld [vmem:[%s0 + $0x1c] sm:$0xf]
  %v23 = vld [vmem:[%s0 + $0x20] sm:$0xf]
  %v24 = vld [vmem:[%s0 + $0x24] sm:$0xf]
  %v25 = vld [vmem:[%s0 + $0x28] sm:$0xf]
  %v26 = vld [vmem:[%s0 + $0x2c] sm:$0xf]
  %v27 = vld [vmem:[%s0 + $0x30] sm:$0xf]
  %v28 = vld [vmem:[%s0 + $0x34] sm:$0xf]
  %v29 = vld [vmem:[%s0 + $0x38] sm:$0xf]
  %v30 = vld [vmem:[%s0 + $0x3c] sm:$0xf]
  %v31 = vld [vmem:[%s1] sm:$0xf]
  %v32 = vld [vmem:[%s1 + $0x4] sm:$0xf]
  %v33 = vld [vmem:[%s1 + $0x8] sm:$0xf]
  %v34 = vld [vmem:[%s1 + $0xc] sm:$0xf]
  %v35 = vld [vmem:[%s1 + $0x10] sm:$0xf]
  %v36 = vld [vmem:[%s1 + $0x14] sm:$0xf]
  %v37 = vld [vmem:[%s1 + $0x18] sm:$0xf]
  %v38 = vld [vmem:[%s1 + $0x1c] sm:$0xf]
  %v39 = vld [vmem:[%s1 + $0x20] sm:$0xf]
  %v40 = vld [vmem:[%s1 + $0x24] sm:$0xf]
  %v41 = vld [vmem:[%s1 + $0x28] sm:$0xf]
  %v42 = vld [vmem:[%s1 + $0x2c] sm:$0xf]
  %v43 = vld [vmem:[%s2] sm:$0x1]
  %v45 = vlaneseq
  %v46 = vshrl.u32 %v45, 7
  %v47 = vsub.s32 0, %v46
  %v48 = vrot.slane %v43, %v47
  %v66 = vunpack.c.l.b16 %v15
  %v67 = vunpack.c.l.b16 %v16
  %v68 = vunpack.c.l.b16 %v17
  %v69 = vunpack.c.l.b16 %v18
  %v70 = vunpack.c.l.b16 %v19
  %v71 = vunpack.c.l.b16 %v20
  %v72 = vunpack.c.l.b16 %v21
  %v73 = vunpack.c.l.b16 %v22
  %v74 = vunpack.c.l.b16 %v23
  %v75 = vunpack.c.l.b16 %v24
  %v76 = vunpack.c.l.b16 %v25
  %v77 = vunpack.c.l.b16 %v26
  %v78 = vunpack.c.l.b16 %v27
  %v79 = vunpack.c.l.b16 %v28
  %v80 = vunpack.c.l.b16 %v29
  %v81 = vunpack.c.l.b16 %v30
  %v82 = vpack.c.b16 %v67, %v66
  %v83 = vpack.c.b16 %v69, %v68
  %v84 = vpack.c.b16 %v71, %v70
  %v85 = vpack.c.b16 %v73, %v72
  %v86 = vpack.c.b16 %v75, %v74
  %v87 = vpack.c.b16 %v77, %v76
  %v88 = vpack.c.b16 %v79, %v78
  %v89 = vpack.c.b16 %v81, %v80
  %v102 = vunpack.c.l.b16 %v31
  %v103 = vunpack.c.l.b16 %v32
  %v104 = vunpack.c.l.b16 %v33
  %v105 = vunpack.c.l.b16 %v34
  %v106 = vunpack.c.l.b16 %v35
  %v107 = vunpack.c.l.b16 %v36
  %v108 = vunpack.c.l.b16 %v37
  %v109 = vunpack.c.l.b16 %v38
  %v110 = vunpack.c.l.b16 %v39
  %v111 = vunpack.c.l.b16 %v40
  %v112 = vunpack.c.l.b16 %v41
  %v113 = vunpack.c.l.b16 %v42
  %v114 = vpack.c.b16 %v103, %v102
  %v115 = vpack.c.b16 %v105, %v104
  %v116 = vpack.c.b16 %v107, %v106
  %v117 = vpack.c.b16 %v109, %v108
  %v118 = vpack.c.b16 %v111, %v110
  %v119 = vpack.c.b16 %v113, %v112
  %vm126 = vcmask 785408
  %v128 = vsel %vm126, %v82, 0
  %v131 = vsel %vm126, %v83, 0
  %v134 = vsel %vm126, %v84, 0
  %v137 = vsel %vm126, %v85, 0
  %v140 = vsel %vm126, %v86, 0
  %v143 = vsel %vm126, %v87, 0
  %v146 = vsel %vm126, %v88, 0
  %v149 = vsel %vm126, %v89, 0
  %151 = vmatprep.subr.bf16.mxu0 0
  %152 = vmatpush1.bf16.msra.mxu0 %v114
  %153 = vmatprep.subr.bf16.mxu0 0
  %154 = vmatpush1.bf16.msra.mxu0 %v115
  %155 = vmatprep.subr.bf16.mxu0 0
  %156 = vmatpush1.bf16.msra.mxu0 %v116
  %157 = vmatprep.subr.bf16.mxu0 0
  %158 = vmatpush1.bf16.msra.mxu0 %v117
  %159 = vmatprep.subr.bf16.mxu0 0
  %160 = vmatpush1.bf16.msra.mxu0 %v118
  %161 = vmatprep.subr.bf16.mxu0 0
  %162 = vmatpush1.bf16.msra.mxu0 %v119
  %163 = vmatprep.subr.bf16.mxu0 0
  %164 = vmatpush1.bf16.msra.mxu0 0
  %165 = vmatprep.subr.bf16.mxu0 0
  %166 = vmatpush1.bf16.msra.mxu0 0
  %167 = vmatprep.subr.bf16.mxu0 0
  %168 = vmatpush1.bf16.msra.mxu0 0
  %169 = vmatprep.subr.bf16.mxu0 0
  %170 = vmatpush1.bf16.msra.mxu0 0
  %171 = vmatprep.subr.bf16.mxu0 0
  %172 = vmatpush1.bf16.msra.mxu0 0
  %173 = vmatprep.subr.bf16.mxu0 0
  %174 = vmatpush1.bf16.msra.mxu0 0
  %175 = vmatprep.subr.bf16.mxu0 0
  %176 = vmatpush1.bf16.msra.mxu0 0
  %177 = vmatprep.subr.bf16.mxu0 0
  %178 = vmatpush1.bf16.msra.mxu0 0
  %179 = vmatprep.subr.bf16.mxu0 0
  %180 = vmatpush1.bf16.msra.mxu0 0
  %181 = vmatprep.subr.bf16.mxu0 0
  %182 = vmatpush1.bf16.msra.mxu0 0
  %183 = vmatprep.mubr.bf16.mxu0 0
  %184 = vmatmul.mubr.bf16.gmra.mrb[0].mxu0 %v128
  %v185 = vpop.f32.mrb[0].mxu0
  %v186 = vadd.f32 %v48, %v185
  %v187 = vpop.f32.mrb[0].mxu0
  %v188 = vpop.f32.mrb[0].mxu0
  %v189 = vadd.f32 %v48, %v188
  %v190 = vpop.f32.mrb[0].mxu0
  %191 = vmatprep.mubr.bf16.mxu0 0
  %192 = vmatmul.mubr.bf16.gmra.mrb[0].mxu0 %v131
  %v193 = vpop.f32.mrb[0].mxu0
  %v194 = vadd.f32 %v48, %v193
  %v195 = vpop.f32.mrb[0].mxu0
  %v196 = vpop.f32.mrb[0].mxu0
  %v197 = vadd.f32 %v48, %v196
  %v198 = vpop.f32.mrb[0].mxu0
  %199 = vmatprep.mubr.bf16.mxu0 0
  %200 = vmatmul.mubr.bf16.gmra.mrb[0].mxu0 %v134
  %v201 = vpop.f32.mrb[0].mxu0
  %v202 = vadd.f32 %v48, %v201
  %v203 = vpop.f32.mrb[0].mxu0
  %v204 = vpop.f32.mrb[0].mxu0
  %v205 = vadd.f32 %v48, %v204
  %v206 = vpop.f32.mrb[0].mxu0
  %207 = vmatprep.mubr.bf16.mxu0 0
  %208 = vmatmul.mubr.bf16.gmra.mrb[0].mxu0 %v137
  %v209 = vpop.f32.mrb[0].mxu0
  %v210 = vadd.f32 %v48, %v209
  %v211 = vpop.f32.mrb[0].mxu0
  %v212 = vpop.f32.mrb[0].mxu0
  %v213 = vadd.f32 %v48, %v212
  %v214 = vpop.f32.mrb[0].mxu0
  %215 = vmatprep.mubr.bf16.mxu0 0
  %216 = vmatmul.mubr.bf16.gmra.mrb[0].mxu0 %v140
  %v217 = vpop.f32.mrb[0].mxu0
  %v218 = vadd.f32 %v48, %v217
  %v219 = vpop.f32.mrb[0].mxu0
  %v220 = vpop.f32.mrb[0].mxu0
  %v221 = vadd.f32 %v48, %v220
  %v222 = vpop.f32.mrb[0].mxu0
  %223 = vmatprep.mubr.bf16.mxu0 0
  %224 = vmatmul.mubr.bf16.gmra.mrb[0].mxu0 %v143
  %v225 = vpop.f32.mrb[0].mxu0
  %v226 = vadd.f32 %v48, %v225
  %v227 = vpop.f32.mrb[0].mxu0
  %v228 = vpop.f32.mrb[0].mxu0
  %v229 = vadd.f32 %v48, %v228
  %v230 = vpop.f32.mrb[0].mxu0
  %231 = vmatprep.mubr.bf16.mxu0 0
  %232 = vmatmul.mubr.bf16.gmra.mrb[0].mxu0 %v146
  %v233 = vpop.f32.mrb[0].mxu0
  %v234 = vadd.f32 %v48, %v233
  %v235 = vpop.f32.mrb[0].mxu0
  %v236 = vpop.f32.mrb[0].mxu0
  %v237 = vadd.f32 %v48, %v236
  %v238 = vpop.f32.mrb[0].mxu0
  %239 = vmatprep.mubr.bf16.mxu0 0
  %240 = vmatmul.mubr.bf16.gmra.mrb[0].mxu0 %v149
  %v241 = vpop.f32.mrb[0].mxu0
  %v242 = vadd.f32 %v48, %v241
  %v243 = vpop.f32.mrb[0].mxu0
  %v244 = vpop.f32.mrb[0].mxu0
  %v245 = vadd.f32 %v48, %v244
  %v246 = vpop.f32.mrb[0].mxu0
  %247 = vdwg.mxu0
  %248 = vst.msk [vmem:[%s3] sm:$0xff] %vm126, %v186
  %249 = vst.msk [vmem:[%s3 + $0x8] sm:$0xff] %vm126, %v189
  %250 = vst.msk [vmem:[%s3 + $0x10] sm:$0xff] %vm126, %v194
  %251 = vst.msk [vmem:[%s3 + $0x18] sm:$0xff] %vm126, %v197
  %252 = vst.msk [vmem:[%s3 + $0x20] sm:$0xff] %vm126, %v202
  %253 = vst.msk [vmem:[%s3 + $0x28] sm:$0xff] %vm126, %v205
  %254 = vst.msk [vmem:[%s3 + $0x30] sm:$0xff] %vm126, %v210
  %255 = vst.msk [vmem:[%s3 + $0x38] sm:$0xff] %vm126, %v213
  %256 = vst.msk [vmem:[%s3 + $0x40] sm:$0xff] %vm126, %v218
  %257 = vst.msk [vmem:[%s3 + $0x48] sm:$0xff] %vm126, %v221
  %258 = vst.msk [vmem:[%s3 + $0x50] sm:$0xff] %vm126, %v226
  %259 = vst.msk [vmem:[%s3 + $0x58] sm:$0xff] %vm126, %v229
  %260 = vst.msk [vmem:[%s3 + $0x60] sm:$0xff] %vm126, %v234
  %261 = vst.msk [vmem:[%s3 + $0x68] sm:$0xff] %vm126, %v237
  %262 = vst.msk [vmem:[%s3 + $0x70] sm:$0xff] %vm126, %v242
  %263 = vst.msk [vmem:[%s3 + $0x78] sm:$0xff] %vm126, %v245
  // Predicated region
  $region14: #{_linear_call.1} parent=0 // pred_check
    _
  $region15: #{_linear_call.1} parent=0 // pred_check_branch
    %265 = sbr.rel (0) target = $region17
  $region16: #{_linear_call.1} parent=0 // pred_region
    _
  $region17: #{_linear_call.1} parent=0 // pred_fallthru
    _
  // Predicated region
  $region18: #{_linear_call.1} parent=0 // pred_check
    _
  $region19: #{_linear_call.1} parent=0 // pred_check_branch
    %267 = sbr.rel (0) target = $region21
  $region20: #{_linear_call.1} parent=0 // pred_region
    _
  $region21: #{_linear_call.1} parent=0 // pred_fallthru
    _

</llo_original>
